<compile_context>
chip_gen: v5e
topology: v5e:2x2
jax: 0.10.0
libtpu: 0.0.40
codegen_flags: <defaults>
</compile_context>

<pallas_src>
import math

import jax
import jax.numpy as jnp
from jax.experimental import pallas as pl
from jax.experimental.pallas import tpu as pltpu


def _round_up(x, m):
    return (x + m - 1) // m * m


_SMALL_FOOTPRINT_BYTES = 1 << 20   # truly tiny problems: single un-gridded block
_FULLK_MAX_K = 2048                # f32: collapsed-K working set stays < ~20 MiB
_TM = 512
_TN = 512
_TK_SPLIT = 1024                   # K tile for the (rare) K > 2048 fallback
_VMEM_LIMIT = 28 << 20             # < v7x 32 MiB scoped; > v5e 16 MiB default


# ---------------------------------------------------------------------------
# Fused matmul + bias + ReLU body.  Used both for the un-gridded tiny path and
# for the collapsed-K tiled path (full K lives in one block, so no accumulator
# or epilogue branching is needed).
# ---------------------------------------------------------------------------
def _linear_relu_block_kernel(x_ref, wt_ref, b_ref, o_ref):
    # x_ref: [tm, K], wt_ref: [K, tn] (pre-transposed), b_ref: [1, tn]
    y = jnp.dot(x_ref[...], wt_ref[...], preferred_element_type=jnp.float32)
    y = y + b_ref[...].astype(jnp.float32)
    o_ref[...] = jnp.maximum(y, 0.0).astype(o_ref.dtype)


def _linear_relu_small(x, wt, b2d):
    M = x.shape[0]
    N = wt.shape[1]
    return pl.pallas_call(
        _linear_relu_block_kernel,
        out_shape=jax.ShapeDtypeStruct((M, N), x.dtype),
        in_specs=[
            pl.BlockSpec(memory_space=pltpu.MemorySpace.VMEM),
            pl.BlockSpec(memory_space=pltpu.MemorySpace.VMEM),
            pl.BlockSpec(memory_space=pltpu.MemorySpace.VMEM),
        ],
        out_specs=pl.BlockSpec(memory_space=pltpu.MemorySpace.VMEM),
    )(x, wt, b2d)


def _linear_relu_fullk(x, wt, b2d, *, tm, tn):
    """2-D (M, N) grid, both parallel; the whole K contraction in one block."""
    M, K = x.shape
    _, N = wt.shape
    grid = (pl.cdiv(M, tm), pl.cdiv(N, tn))
    return pl.pallas_call(
        _linear_relu_block_kernel,
        out_shape=jax.ShapeDtypeStruct((M, N), x.dtype),
        grid_spec=pltpu.PrefetchScalarGridSpec(
            num_scalar_prefetch=0,
            grid=grid,
            in_specs=[
                pl.BlockSpec((tm, K), lambda i, j: (i, 0)),
                pl.BlockSpec((K, tn), lambda i, j: (0, j)),
                pl.BlockSpec((1, tn), lambda i, j: (0, j)),
            ],
            out_specs=pl.BlockSpec((tm, tn), lambda i, j: (i, j)),
        ),
        compiler_params=pltpu.CompilerParams(
            dimension_semantics=("parallel", "parallel"),
            vmem_limit_bytes=_VMEM_LIMIT,
        ),
    )(x, wt, b2d)


# ---------------------------------------------------------------------------
# Fallback for very large K (> _FULLK_MAX_K): 3-D grid with an f32 accumulator;
# bias + ReLU only in the k==last epilogue.  Only K is zero-padded (required
# for reduction correctness); M/N edges use partial blocks.
# ---------------------------------------------------------------------------
def _linear_relu_ksplit_kernel(x_ref, wt_ref, b_ref, o_ref, acc_ref):
    k = pl.program_id(2)

    @pl.when(k == 0)
    def _():
        acc_ref[...] = jnp.zeros_like(acc_ref)

    acc_ref[...] += jnp.dot(
        x_ref[...], wt_ref[...], preferred_element_type=jnp.float32
    )

    @pl.when(k == pl.num_programs(2) - 1)
    def _():
        y = acc_ref[...] + b_ref[...].astype(jnp.float32)
        o_ref[...] = jnp.maximum(y, 0.0).astype(o_ref.dtype)


def _linear_relu_ksplit(x, wt, b2d, *, tm, tn, tk=_TK_SPLIT):
    M, K = x.shape
    _, N = wt.shape
    Kp = _round_up(K, tk)
    if Kp != K:
        x = jnp.pad(x, ((0, 0), (0, Kp - K)))
        wt = jnp.pad(wt, ((0, Kp - K), (0, 0)))
    grid = (pl.cdiv(M, tm), pl.cdiv(N, tn), Kp // tk)
    return pl.pallas_call(
        _linear_relu_ksplit_kernel,
        out_shape=jax.ShapeDtypeStruct((M, N), x.dtype),
        grid_spec=pltpu.PrefetchScalarGridSpec(
            num_scalar_prefetch=0,
            grid=grid,
            in_specs=[
                pl.BlockSpec((tm, tk), lambda i, j, k: (i, k)),
                pl.BlockSpec((tk, tn), lambda i, j, k: (k, j)),
                pl.BlockSpec((1, tn), lambda i, j, k: (0, j)),
            ],
            out_specs=pl.BlockSpec((tm, tn), lambda i, j, k: (i, j)),
            scratch_shapes=[pltpu.VMEM((tm, tn), jnp.float32)],
        ),
        compiler_params=pltpu.CompilerParams(
            dimension_semantics=("parallel", "parallel", "arbitrary"),
            vmem_limit_bytes=_VMEM_LIMIT,
        ),
    )(x, wt, b2d)


# ---------------------------------------------------------------------------
# Wrapper API
# ---------------------------------------------------------------------------
def prepare_linear_params(w1, b1):
    """One-time weight preprocessing (hoisted out of the per-call path).

    w1 is [out_features, in_features] (PyTorch layout); returns wt=[K, N] and
    a 2-D bias row so the kernel never transposes/reshapes in HBM per call.
    """
    N, K = w1.shape
    assert b1.shape == (N,)
    return w1.T, b1.reshape(1, N)


def linear_relu_prepared(x, wt, b2d):
    """y = relu(x @ wt + b) with wt already in [K, N] layout."""
    orig_shape = x.shape
    K, N = wt.shape
    assert orig_shape[-1] == K, "in_features mismatch"

    x2 = x.reshape(-1, K)
    M = x2.shape[0]

    footprint = (M * K + K * N + M * N + N) * x2.dtype.itemsize
    if footprint <= _SMALL_FOOTPRINT_BYTES:
        out = _linear_relu_small(x2, wt, b2d)
    else:
        # Full dim as the tile is always layout-legal; otherwise 512 tiles
        # (multiple of 8 / 128) with partial edge blocks.
        tm = M if M <= _TM else _TM
        tn = N if N <= _TN else _TN
        if K <= _FULLK_MAX_K:
            out = _linear_relu_fullk(x2, wt, b2d, tm=tm, tn=tn)
        else:
            out = _linear_relu_ksplit(x2, wt, b2d, tm=tm, tn=tn)
    return out.reshape(orig_shape[:-1] + (N,))


def linear_relu(x, w1, b1):
    """Convenience wrapper (PyTorch-layout w1 [N, K]).

    Prefer prepare_linear_params() once + linear_relu_prepared() per call to
    avoid paying the weight transpose in HBM on every invocation.
    """
    wt, b2d = prepare_linear_params(w1, b1)
    return linear_relu_prepared(x, wt, b2d)


def init_params(key):
    """Mirror the PyTorch module: kaiming_uniform_(a=sqrt(5)) weight, zero bias."""
    out_features, in_features = 4, 4
    a = math.sqrt(5.0)
    gain = math.sqrt(2.0 / (1.0 + a * a))
    bound = gain * math.sqrt(3.0 / in_features)
    w1 = jax.random.uniform(
        key, (out_features, in_features), dtype=jnp.float32,
        minval=-bound, maxval=bound,
    )
    b1 = jnp.zeros((out_features,), dtype=jnp.float32)
    return w1, b1


if __name__ == "__main__":
    key = jax.random.PRNGKey(0)
    k_w, k_x, k_big = jax.random.split(key, 3)

    # Shapes implied by the module: (batch=8, in_features=4) -> (8, out_features=4).
    w1, b1 = init_params(k_w)
    x = jax.random.normal(k_x, (8, 4), dtype=jnp.float32)

    wt, b2d = prepare_linear_params(w1, b1)   # hoisted, one-time
    y = jax.block_until_ready(linear_relu_prepared(x, wt, b2d))
    y_ref = jnp.maximum(x @ w1.T + b1, 0.0)
    assert y.shape == (8, 4)
    assert jnp.allclose(y, y_ref, atol=1e-5, rtol=1e-5)

    # Secondary check: exercise the tiled, M/N-parallel collapsed-K path.
    Mb, Kb, Nb = 1024, 1024, 512
    kb1, kb2, kb3 = jax.random.split(k_big, 3)
    xb = jax.random.normal(kb1, (Mb, Kb), dtype=jnp.float32)
    wb = jax.random.normal(kb2, (Nb, Kb), dtype=jnp.float32) * 0.02
    bb = jax.random.normal(kb3, (Nb,), dtype=jnp.float32)
    wtb, bb2d = prepare_linear_params(wb, bb)
    yb = jax.block_until_ready(linear_relu_prepared(xb, wtb, bb2d))
    yb_ref = jnp.maximum(xb @ wb.T + bb, 0.0)
    assert jnp.allclose(yb, yb_ref, atol=5e-2, rtol=5e-2)

    print("KERNEL_OK")
</pallas_src>

<mosaic_0001>
module attributes {stable_mosaic.version = 11 : i64} {
  func.func @_linear_relu_block_kernel(%arg0: memref<8x4xf32, #tpu.memory_space<vmem>>, %arg1: memref<4x4xf32, #tpu.memory_space<vmem>>, %arg2: memref<1x4xf32, #tpu.memory_space<vmem>>, %arg3: memref<8x4xf32, #tpu.memory_space<vmem>>) attributes {dimension_semantics = [], scalar_prefetch = 0 : i64, scratch_operands = 0 : i64, tpu.core_type = #tpu.core_type<tc>} {
    %c0 = arith.constant 0 : index
    %c0_0 = arith.constant 0 : index
    %0 = vector.load %arg0[%c0, %c0_0] : memref<8x4xf32, #tpu.memory_space<vmem>>, vector<8x4xf32>
    %c0_1 = arith.constant 0 : index
    %c0_2 = arith.constant 0 : index
    %1 = vector.load %arg1[%c0_1, %c0_2] : memref<4x4xf32, #tpu.memory_space<vmem>>, vector<4x4xf32>
    %cst = arith.constant dense<0.000000e+00> : vector<8x4xf32>
    %2 = tpu.matmul %0, %1, %cst {dimension_numbers = #tpu.dot_dimension_numbers<[1], [0], [0], [1], [0, 0, 1, 1], [], []>} : vector<8x4xf32>, vector<4x4xf32>, vector<8x4xf32> -> vector<8x4xf32>
    %c0_3 = arith.constant 0 : index
    %c0_4 = arith.constant 0 : index
    %3 = vector.load %arg2[%c0_3, %c0_4] : memref<1x4xf32, #tpu.memory_space<vmem>>, vector<1x4xf32>
    %4 = vector.broadcast %3 : vector<1x4xf32> to vector<8x4xf32>
    %5 = arith.addf %2, %4 : vector<8x4xf32>
    %cst_5 = arith.constant 0.000000e+00 : f32
    %6 = vector.broadcast %cst_5 : f32 to vector<8x4xf32>
    %7 = arith.maximumf %5, %6 : vector<8x4xf32>
    %c0_6 = arith.constant 0 : index
    %c0_7 = arith.constant 0 : index
    %8 = vector.load %arg3[%c0_6, %c0_7] : memref<8x4xf32, #tpu.memory_space<vmem>>, vector<8x4xf32>
    tpu.vector_store %arg3[%c0_6, %c0_7], %7 {strides = array<i32>} : memref<8x4xf32, #tpu.memory_space<vmem>>, vector<8x4xf32>,
    return
  }
}

</mosaic_0001>

<llo_original>
// kernel: tpu_custom_call.1
$region0: #{tpu_custom_call.1}
  #allocation0 [shape = 'u32[]', space=smem, size = 0x4, offset = 0x4, fixed_abs, tag = 'smem constant byte address 0x4 - core index']
  #allocation1 [shape = 'u32[72,128]{1,0:T(1,128)}', space=vmem, size = 0x9000, scoped, tag = 'internal scratch']
  %s0 = inlined_call_operand.vmem [shape: f32[8,4], index: 0, kind: input, shape index: {}]
  %s1 = inlined_call_operand.vmem [shape: f32[4,4], index: 1, kind: input, shape index: {}]
  %s2 = inlined_call_operand.vmem [shape: f32[1,4], index: 2, kind: input, shape index: {}]
  %s3 = inlined_call_operand.vmem [shape: f32[8,4], index: 3, kind: output, shape index: {}]
  %s4 = sld [smem:[#allocation0]]
  $region22: #{tpu_custom_call.1} parent=0
    _
  %s6 = ssub.s32 1, %s4
  %s7 = scalar_select 0, %s6, %s4
  // Predicated region
  $region2: #{tpu_custom_call.1} parent=0 // pred_check
    _
  $region3: #{tpu_custom_call.1} parent=0 // pred_check_branch
    %9 = sbr.rel (0) target = $region5
  $region4: #{tpu_custom_call.1} parent=0 // pred_region
    _
  $region5: #{tpu_custom_call.1} parent=0 // pred_fallthru
    _
  // Predicated region
  $region6: #{tpu_custom_call.1} parent=0 // pred_check
    _
  $region7: #{tpu_custom_call.1} parent=0 // pred_check_branch
    %11 = sbr.rel (0) target = $region9
  $region8: #{tpu_custom_call.1} parent=0 // pred_region
    _
  $region9: #{tpu_custom_call.1} parent=0 // pred_fallthru
    _
  // Predicated region
  $region10: #{tpu_custom_call.1} parent=0 // pred_check
    _
  $region11: #{tpu_custom_call.1} parent=0 // pred_check_branch
    %13 = sbr.rel (0) target = $region13
  $region12: #{tpu_custom_call.1} parent=0 // pred_region
    _
  $region13: #{tpu_custom_call.1} parent=0 // pred_fallthru
    _
  %v14 = vld [vmem:[%s0] sm:$0xff]
  %v15 = vld [vmem:[%s1] sm:$0xf]
  %v16 = vld [vmem:[%s2] sm:$0x1]
  %v18 = vperm.slane %v16, 0
  %vm20 = vcmask 31744
  %v22 = vsel %vm20, %v14, 0
  %vm24 = vcmask 1043456
  %v26 = vsel %vm24, %v15, 0
  %28 = vmatpush.msra.mxu0 0.0
  %29 = vmatpush.msra.mxu0 0.0
  %30 = vmatpush.msra.mxu0 0.0
  %31 = vmatpush.msra.mxu0 0.0
  %32 = vmatpush.msra.mxu0 0.0
  %33 = vmatpush.msra.mxu0 0.0
  %34 = vmatpush.msra.mxu0 0.0
  %35 = vmatpush.msra.mxu0 0.0
  %36 = vmatpush.msra.mxu0 0.0
  %37 = vmatpush.msra.mxu0 0.0
  %38 = vmatpush.msra.mxu0 0.0
  %39 = vmatpush.msra.mxu0 0.0
  %40 = vmatpush.msra.mxu0 0.0
  %41 = vmatpush.msra.mxu0 0.0
  %42 = vmatpush.msra.mxu0 0.0
  %43 = vmatpush.msra.mxu0 %v26
  %44 = vmatmul.f32.gmra.mxu0 %v22
  %v45 = vpop.f32.mrf.mxu0
  %v46 = vadd.f32 %v18, %v45
  %47 = vdwg.mxu0
  %v48 = vmax.f32 %v46, 0.0
  %49 = vst.msk [vmem:[%s3] sm:$0xff] %vm20, %v48
  // Predicated region
  $region14: #{tpu_custom_call.1} parent=0 // pred_check
    _
  $region15: #{tpu_custom_call.1} parent=0 // pred_check_branch
    %51 = sbr.rel (0) target = $region17
  $region16: #{tpu_custom_call.1} parent=0 // pred_region
    _
  $region17: #{tpu_custom_call.1} parent=0 // pred_fallthru
    _
  // Predicated region
  $region18: #{tpu_custom_call.1} parent=0 // pred_check
    _
  $region19: #{tpu_custom_call.1} parent=0 // pred_check_branch
    %53 = sbr.rel (0) target = $region21
  $region20: #{tpu_custom_call.1} parent=0 // pred_region
    _
  $region21: #{tpu_custom_call.1} parent=0 // pred_fallthru
    _

</llo_original>
